<compile_context>
chip_gen: v6e
topology: v6e:2x2x1
jax: 0.10.0
libtpu: 0.0.40
codegen_flags: <defaults>
</compile_context>

<pallas_src>
import functools

import jax
import jax.numpy as jnp
from jax.experimental import pallas as pl
from jax.experimental.pallas import tpu as pltpu


_TM_CAP = 512      # max row tile
_TN_CAP = 1024     # max fused-column tile


def _round_up(x, m):
    return (x + m - 1) // m * m


def _cdiv(a, b):
    return (a + b - 1) // b


def _vmem_budget_bytes():
    """Per-generation VMEM budget (leaves ~25% headroom for compiler scratch)."""
    cap = None
    try:
        cap = getattr(pltpu.get_tpu_info(), "vmem_capacity_bytes", None)
    except Exception:
        cap = None
    if not cap:
        cap = 64 * 1024 * 1024        # conservative (v7x-sized) fallback
    return max(32 * 1024 * 1024, int(cap) * 3 // 4)


def _sublane(dtype):
    return 16 if jnp.dtype(dtype) == jnp.dtype(jnp.bfloat16) else 8


def _tn_candidates(dp):
    """Multiples of 128 that evenly divide the 128-aligned fused width, descending."""
    c = dp // 128
    return [128 * d for d in range(c, 0, -1) if c % d == 0]


def _select_fused_tiles(M, H, Dp, itemsize, budget, sub):
    """Pick (tm, tn) so the double-buffered x/w/out tiles fit the VMEM budget."""
    words = budget // (2 * itemsize)           # elements for one buffer set
    picked = None
    for tn in _tn_candidates(Dp):
        if tn > _TN_CAP:
            continue
        tm_room = (words - H * tn) // (H + tn)
        if tm_room < sub:
            continue
        tm_cap = min(_TM_CAP, (tm_room // sub) * sub)
        n_rows = _cdiv(M, tm_cap)
        tm = _round_up(_cdiv(M, n_rows), sub)   # balanced row tiles (no fat pad)
        picked = (tm, tn)
        break
    if picked is None:
        # Degenerate (huge H) fallback: smallest legal tiles.
        picked = (_round_up(min(M, 128), sub), 128)
    tm, tn = picked

    # v7x has 2 TensorCores: guarantee >=2 tiles on a parallel axis when we can
    # (decode-sized M with a single column tile -> split the fused columns).
    nr = _round_up(M, tm) // tm
    nc = Dp // tn
    if nr == 1 and nc == 1:
        for cand in _tn_candidates(Dp):
            if cand < Dp:
                tn = cand
                break
    return tm, tn


# ---------------------------------------------------------------------------
# Weight preparation (host-side, ONCE at model init)
# ---------------------------------------------------------------------------
def prepare_qkv_weights(wq, wk, wv, compute_dtype=None):
    """Pre-transpose / cast / fuse / pad the projection weights once.

    wq: (Dq, H), wk/wv: (Dkv, H) in PyTorch nn.Linear (out, in) layout.
    Returns (weights_tuple, Dq, Dkv):
      * 3-tuple of (H, D*) arrays when Dq, Dkv are 128-aligned and the resident
        working set fits VMEM (split-output kernel, no wrapper slicing), else
      * 1-tuple with one fused, 128-column-padded (H, Dp) weight.
    """
    Dq, H = wq.shape
    Dkv = wk.shape[0]
    Dtot = Dq + 2 * Dkv
    cdtype = jnp.dtype(compute_dtype if compute_dtype is not None else wq.dtype)
    itemsize = cdtype.itemsize
    budget = _vmem_budget_bytes()

    aligned = (Dq % 128 == 0) and (Dkv % 128 == 0)
    # Split path keeps all three weights resident + a >=128-row x/out tile,
    # double-buffered.
    split_ok = aligned and 2 * (H * Dtot + 128 * (H + Dtot)) * itemsize <= budget

    wq_t = jnp.asarray(wq, cdtype).T
    wk_t = jnp.asarray(wk, cdtype).T
    wv_t = jnp.asarray(wv, cdtype).T
    if split_ok:
        weights = (wq_t, wk_t, wv_t)
    else:
        w_fused = jnp.concatenate([wq_t, wk_t, wv_t], axis=1)
        Dp = _round_up(Dtot, 128)
        if Dp != Dtot:
            w_fused = jnp.pad(w_fused, ((0, 0), (0, Dp - Dtot)))
        weights = (w_fused,)
    weights = jax.block_until_ready(weights)
    return weights, Dq, Dkv


# ---------------------------------------------------------------------------
# Kernels
# ---------------------------------------------------------------------------
def _qkv_fused_kernel(x_ref, w_ref, o_ref):
    """(tm,H) x (H,tn) -> (tm,tn) fused QKV tile; f32 MXU accumulation."""
    o_ref[...] = jnp.dot(
        x_ref[...], w_ref[...], preferred_element_type=jnp.float32
    ).astype(o_ref.dtype)


def _qkv_split_kernel(x_ref, wq_ref, wk_ref, wv_ref, q_ref, k_ref, v_ref):
    """One row tile against resident Wq/Wk/Wv; three lane-dense outputs."""
    x = x_ref[...]
    q_ref[...] = jnp.dot(x, wq_ref[...],
                         preferred_element_type=jnp.float32).astype(q_ref.dtype)
    k_ref[...] = jnp.dot(x, wk_ref[...],
                         preferred_element_type=jnp.float32).astype(k_ref.dtype)
    v_ref[...] = jnp.dot(x, wv_ref[...],
                         preferred_element_type=jnp.float32).astype(v_ref.dtype)


# ---------------------------------------------------------------------------
# Forward paths
# ---------------------------------------------------------------------------
def _forward_fused(x, w_fused, dq, dkv):
    B, S, H = x.shape
    M = B * S
    Dp = w_fused.shape[1]
    cdtype = w_fused.dtype
    itemsize = jnp.dtype(cdtype).itemsize
    sub = _sublane(cdtype)
    budget = _vmem_budget_bytes()

    x2d = x.reshape(M, H).astype(cdtype)
    tm, tn = _select_fused_tiles(M, H, Dp, itemsize, budget, sub)
    Mp = _round_up(M, tm)
    if Mp != M:
        x2d = jnp.pad(x2d, ((0, Mp - M), (0, 0)))
    nr, nc = Mp // tm, Dp // tn

    # Traffic-aware loop order: the fastest (last) grid axis decides which
    # operand gets re-streamed from HBM; keep the more expensive one resident.
    rows_fastest = (nc - 1) * Mp < (nr - 1) * Dp
    if rows_fastest:
        grid = (nc, nr)
        x_spec = pl.BlockSpec((tm, H), lambda j, i: (i, 0))
        w_spec = pl.BlockSpec((H, tn), lambda j, i: (0, j))   # constant over i
        o_spec = pl.BlockSpec((tm, tn), lambda j, i: (i, j))
    else:
        grid = (nr, nc)
        x_spec = pl.BlockSpec((tm, H), lambda i, j: (i, 0))   # constant over j
        w_spec = pl.BlockSpec((H, tn), lambda i, j: (0, j))
        o_spec = pl.BlockSpec((tm, tn), lambda i, j: (i, j))

    fused = pl.pallas_call(
        _qkv_fused_kernel,
        out_shape=jax.ShapeDtypeStruct((Mp, Dp), cdtype),
        grid_spec=pltpu.PrefetchScalarGridSpec(
            num_scalar_prefetch=0,
            grid=grid,
            in_specs=[x_spec, w_spec],
            out_specs=o_spec,
        ),
        compiler_params=pltpu.CompilerParams(
            dimension_semantics=("parallel", "parallel"),
            vmem_limit_bytes=budget,
        ),
    )(x2d, w_fused)

    q = fused[:M, :dq].reshape(B, S, dq)
    k = fused[:M, dq:dq + dkv].reshape(B, S, dkv)
    v = fused[:M, dq + dkv:dq + 2 * dkv].reshape(B, S, dkv)
    return q, k, v


def _forward_split(x, wq_t, wk_t, wv_t):
    B, S, H = x.shape
    M = B * S
    Dq, Dkv = wq_t.shape[1], wk_t.shape[1]
    Dtot = Dq + 2 * Dkv
    cdtype = wq_t.dtype
    itemsize = jnp.dtype(cdtype).itemsize
    sub = _sublane(cdtype)
    budget = _vmem_budget_bytes()

    x2d = x.reshape(M, H).astype(cdtype)
    words = budget // (2 * itemsize)
    tm_room = (words - H * Dtot) // (H + Dtot)
    tm_cap = min(_TM_CAP, max(sub, (tm_room // sub) * sub))
    n_rows = _cdiv(M, tm_cap)
    tm = _round_up(_cdiv(M, n_rows), sub)
    Mp = _round_up(M, tm)
    if Mp != M:
        x2d = jnp.pad(x2d, ((0, Mp - M), (0, 0)))
    nr = Mp // tm

    q2d, k2d, v2d = pl.pallas_call(
        _qkv_split_kernel,
        out_shape=(jax.ShapeDtypeStruct((Mp, Dq), cdtype),
                   jax.ShapeDtypeStruct((Mp, Dkv), cdtype),
                   jax.ShapeDtypeStruct((Mp, Dkv), cdtype)),
        grid_spec=pltpu.PrefetchScalarGridSpec(
            num_scalar_prefetch=0,
            grid=(nr,),
            in_specs=[
                pl.BlockSpec((tm, H), lambda i: (i, 0)),
                pl.BlockSpec((H, Dq), lambda i: (0, 0)),    # resident, DMA'd once
                pl.BlockSpec((H, Dkv), lambda i: (0, 0)),
                pl.BlockSpec((H, Dkv), lambda i: (0, 0)),
            ],
            out_specs=[
                pl.BlockSpec((tm, Dq), lambda i: (i, 0)),
                pl.BlockSpec((tm, Dkv), lambda i: (i, 0)),
                pl.BlockSpec((tm, Dkv), lambda i: (i, 0)),
            ],
        ),
        compiler_params=pltpu.CompilerParams(
            dimension_semantics=("parallel",),
            vmem_limit_bytes=budget,
        ),
    )(x2d, wq_t, wk_t, wv_t)

    return (q2d[:M].reshape(B, S, Dq),
            k2d[:M].reshape(B, S, Dkv),
            v2d[:M].reshape(B, S, Dkv))


@functools.partial(jax.jit, static_argnames=("dq", "dkv"))
def gqa_qkv_forward(hidden_states, weights, *, dq, dkv):
    """hidden_states: (B,S,H); weights from prepare_qkv_weights. Returns Q,K,V."""
    if len(weights) == 3:
        return _forward_split(hidden_states, *weights)
    return _forward_fused(hidden_states, weights[0], dq, dkv)


# ---------------------------------------------------------------------------
if __name__ == "__main__":
    key = jax.random.PRNGKey(0)
    kx, kq, kk, kv, kx2, kq2, kk2, kv2 = jax.random.split(key, 8)

    # --- Config A: small GQA config (head widths not 128-aligned -> fused path)
    hidden_size, head_dim = 32, 8
    num_attention_heads, num_key_value_heads = 4, 2
    B, S = 2, 8
    Dq = num_attention_heads * head_dim       # 32
    Dkv = num_key_value_heads * head_dim      # 16

    hidden_states = jax.random.normal(kx, (B, S, hidden_size), dtype=jnp.float32)
    scale = 1.0 / jnp.sqrt(hidden_size)
    wq = jax.random.uniform(kq, (Dq, hidden_size), jnp.float32, -scale, scale)
    wk = jax.random.uniform(kk, (Dkv, hidden_size), jnp.float32, -scale, scale)
    wv = jax.random.uniform(kv, (Dkv, hidden_size), jnp.float32, -scale, scale)

    # Weights fused / cast / padded ONCE at init (outside the per-call path).
    weights_f32, dq, dkv = prepare_qkv_weights(wq, wk, wv)
    Q, K, V = gqa_qkv_forward(hidden_states, weights_f32, dq=dq, dkv=dkv)
    jax.block_until_ready((Q, K, V))

    Q_ref = hidden_states @ wq.T
    K_ref = hidden_states @ wk.T
    V_ref = hidden_states @ wv.T
    assert Q.shape == (B, S, Dq) and K.shape == (B, S, Dkv) and V.shape == (B, S, Dkv)
    assert jnp.allclose(Q, Q_ref, atol=1e-5, rtol=1e-5)
    assert jnp.allclose(K, K_ref, atol=1e-5, rtol=1e-5)
    assert jnp.allclose(V, V_ref, atol=1e-5, rtol=1e-5)

    # bf16 compute path (production inference dtype; accumulation stays f32).
    weights_bf16, _, _ = prepare_qkv_weights(wq, wk, wv, compute_dtype=jnp.bfloat16)
    Qb, Kb, Vb = gqa_qkv_forward(hidden_states, weights_bf16, dq=dq, dkv=dkv)
    jax.block_until_ready((Qb, Kb, Vb))
    assert jnp.allclose(Qb.astype(jnp.float32), Q_ref, atol=5e-2, rtol=5e-2)
    assert jnp.allclose(Kb.astype(jnp.float32), K_ref, atol=5e-2, rtol=5e-2)
    assert jnp.allclose(Vb.astype(jnp.float32), V_ref, atol=5e-2, rtol=5e-2)

    # --- Config B: 128-aligned head_dim -> three lane-dense output path
    hidden_size2, head_dim2, heads2, kv_heads2 = 256, 128, 2, 1
    B2, S2 = 1, 8
    Dq2, Dkv2 = heads2 * head_dim2, kv_heads2 * head_dim2   # 256, 128
    hs2 = jax.random.normal(kx2, (B2, S2, hidden_size2), dtype=jnp.float32)
    scale2 = 1.0 / jnp.sqrt(hidden_size2)
    wq2 = jax.random.uniform(kq2, (Dq2, hidden_size2), jnp.float32, -scale2, scale2)
    wk2 = jax.random.uniform(kk2, (Dkv2, hidden_size2), jnp.float32, -scale2, scale2)
    wv2 = jax.random.uniform(kv2, (Dkv2, hidden_size2), jnp.float32, -scale2, scale2)

    weights2, dq2, dkv2 = prepare_qkv_weights(wq2, wk2, wv2)
    assert len(weights2) == 3  # split-output path selected
    Q2, K2, V2 = gqa_qkv_forward(hs2, weights2, dq=dq2, dkv=dkv2)
    jax.block_until_ready((Q2, K2, V2))
    assert jnp.allclose(Q2, hs2 @ wq2.T, atol=1e-3, rtol=1e-3)
    assert jnp.allclose(K2, hs2 @ wk2.T, atol=1e-3, rtol=1e-3)
    assert jnp.allclose(V2, hs2 @ wv2.T, atol=1e-3, rtol=1e-3)

    print("KERNEL_OK")
</pallas_src>

<mosaic_0001>
module attributes {stable_mosaic.version = 11 : i64} {
  func.func @_qkv_fused_kernel(%arg0: i32, %arg1: i32, %arg2: memref<16x32xf32, #tpu.memory_space<vmem>>, %arg3: memref<32x128xf32, #tpu.memory_space<vmem>>, %arg4: memref<16x128xf32, #tpu.memory_space<vmem>>) attributes {dimension_semantics = [#tpu.dimension_semantics<parallel>, #tpu.dimension_semantics<parallel>], iteration_bounds = array<i64: 1, 1>, scalar_prefetch = 0 : i64, scratch_operands = 0 : i64, tpu.core_type = #tpu.core_type<tc>, window_params = [{transform_indices = @transform_0, window_bounds = array<i64: 16, 32>}, {transform_indices = @transform_1, window_bounds = array<i64: 32, 128>}, {transform_indices = @transform_2, window_bounds = array<i64: 16, 128>}]} {
    %c0 = arith.constant 0 : index
    %c0_0 = arith.constant 0 : index
    %0 = vector.load %arg2[%c0, %c0_0] : memref<16x32xf32, #tpu.memory_space<vmem>>, vector<16x32xf32>
    %c0_1 = arith.constant 0 : index
    %c0_2 = arith.constant 0 : index
    %1 = vector.load %arg3[%c0_1, %c0_2] : memref<32x128xf32, #tpu.memory_space<vmem>>, vector<32x128xf32>
    %cst = arith.constant dense<0.000000e+00> : vector<16x128xf32>
    %2 = tpu.matmul %0, %1, %cst {dimension_numbers = #tpu.dot_dimension_numbers<[1], [0], [0], [1], [0, 0, 1, 1], [], []>} : vector<16x32xf32>, vector<32x128xf32>, vector<16x128xf32> -> vector<16x128xf32>
    %c0_3 = arith.constant 0 : index
    %c0_4 = arith.constant 0 : index
    %3 = vector.load %arg4[%c0_3, %c0_4] : memref<16x128xf32, #tpu.memory_space<vmem>>, vector<16x128xf32>
    tpu.vector_store %arg4[%c0_3, %c0_4], %2 {strides = array<i32>} : memref<16x128xf32, #tpu.memory_space<vmem>>, vector<16x128xf32>,
    return
  }
  func.func @transform_0(%arg0: i32, %arg1: i32) -> (i32, i32) {
    %c0_i32 = arith.constant 0 : i32
    %c0_i32_0 = arith.constant 0 : i32
    return %arg0, %c0_i32 : i32, i32
  }
  func.func @transform_1(%arg0: i32, %arg1: i32) -> (i32, i32) {
    %c0_i32 = arith.constant 0 : i32
    %c0_i32_0 = arith.constant 0 : i32
    return %c0_i32, %arg1 : i32, i32
  }
  func.func @transform_2(%arg0: i32, %arg1: i32) -> (i32, i32) {
    %c0_i32 = arith.constant 0 : i32
    return %arg0, %arg1 : i32, i32
  }
}

</mosaic_0001>

<llo_original>
// kernel: gqa_qkv_forward.1
$region0: #{gqa_qkv_forward.1}
  #allocation0 [shape = 'u32[]', space=smem, size = 0x4, offset = 0x4, fixed_abs, tag = 'smem constant byte address 0x4 - core index']
  #allocation1 [shape = 'u32[144,128]{1,0:T(1,128)}', space=vmem, size = 0x12000, scoped, tag = 'internal scratch']
  %s0 = inlined_call_operand.hbm [shape: f32[16,32], index: 0, kind: input, shape index: {}]
  %s1 = inlined_call_operand.hbm [shape: f32[32,128], index: 1, kind: input, shape index: {}]
  %s2 = inlined_call_operand.vmem [shape: f32[16,128], index: 2, kind: output, shape index: {}]
  %s3 = sld [smem:[#allocation0]]
  $region26: #{gqa_qkv_forward.1} parent=0
    _
  %s5 = ssub.s32 1, %s3
  %s6 = scalar_select 0, %s5, %s3
  $region1: #{gqa_qkv_forward.1} parent=0
    #allocation2 [shape = 'u8[8192]{0}', space=vmem, size = 0x2000, scoped, tag = 'input window, operand 0, single buffered']
    #allocation3 [shape = 's32[1]{0}', space=sflag, size = 0x4, scoped, tag = 'scoped memory for gqa_qkv_forward.1']
    #allocation4 [shape = 'u8[16384]{0}', space=vmem, size = 0x4000, scoped, tag = 'input window, operand 1, single buffered']
    #allocation5 [shape = 's32[1]{0}', space=sflag, size = 0x4, scoped, tag = 'scoped memory for gqa_qkv_forward.1']
    %7 = vsyncpa [#allocation3], 0
    %8 = vsyncpa [#allocation5], 0
    // Predicated region
    $region2: #{gqa_qkv_forward.1} parent=1 // pred_check
      _
    $region3: #{gqa_qkv_forward.1} parent=1 // pred_check_branch
      %10 = sbr.rel (0) target = $region5
    $region4: #{gqa_qkv_forward.1} parent=1 // pred_region
      %s12 = ssub.s32 256, 256
      %13 = vsyncadd [#allocation3], %s12
      %s14 = sshll.u32 [#allocation2], 4
      %s15 = int_to_ptr.vmem [resolvable:$true] %s14
      %20 = dma.hbm_to_vmem [thread:$0]  %s0, 256, %s15, [#allocation3], 128, 128, 8
    $region5: #{gqa_qkv_forward.1} parent=1 // pred_fallthru
      _
    // Predicated region
    $region6: #{gqa_qkv_forward.1} parent=1 // pred_check
      _
    $region7: #{gqa_qkv_forward.1} parent=1 // pred_check_branch
      %22 = sbr.rel (0) target = $region9
    $region8: #{gqa_qkv_forward.1} parent=1 // pred_region
      %s24 = ssub.s32 512, 512
      %25 = vsyncadd [#allocation5], %s24
      %s26 = sshll.u32 [#allocation4], 4
      %s27 = int_to_ptr.vmem [resolvable:$true] %s26
      %32 = dma.hbm_to_vmem [thread:$0]  %s1, 512, %s27, [#allocation5], 128, 128, 8
    $region9: #{gqa_qkv_forward.1} parent=1 // pred_fallthru
      _
    // Predicated region
    $region10: #{gqa_qkv_forward.1} parent=1 // pred_check
      _
    $region11: #{gqa_qkv_forward.1} parent=1 // pred_check_branch
      %34 = sbr.rel (0) target = $region13
    $region12: #{gqa_qkv_forward.1} parent=1 // pred_region
      %35 = dma.done [#allocation3], 256
    $region13: #{gqa_qkv_forward.1} parent=1 // pred_fallthru
      _
    // Predicated region
    $region14: #{gqa_qkv_forward.1} parent=1 // pred_check
      _
    $region15: #{gqa_qkv_forward.1} parent=1 // pred_check_branch
      %37 = sbr.rel (0) target = $region17
    $region16: #{gqa_qkv_forward.1} parent=1 // pred_region
      %38 = dma.done [#allocation5], 512
    $region17: #{gqa_qkv_forward.1} parent=1 // pred_fallthru
      _
    %v39 = vld [vmem:[#allocation2] sm:$0xff]
    %v40 = vld [vmem:[#allocation2 + $0x8] sm:$0xff]
    %v41 = vld [vmem:[#allocation4] sm:$0xff]
    %v42 = vld [vmem:[#allocation4 + $0x8] sm:$0xff]
    %v43 = vld [vmem:[#allocation4 + $0x10] sm:$0xff]
    %v44 = vld [vmem:[#allocation4 + $0x18] sm:$0xff]
    %vm45 = vcmask 261120
    %v47 = vsel %vm45, %v39, 0
    %v50 = vsel %vm45, %v40, 0
    %52 = vmatprep.subr.mxu0 0.0
    %53 = vmatpush1.msra.mxu0 0.0
    %54 = vmatprep.subr.mxu0 0.0
    %55 = vmatpush1.msra.mxu0 0.0
    %56 = vmatprep.subr.mxu0 0.0
    %57 = vmatpush1.msra.mxu0 0.0
    %58 = vmatprep.subr.mxu0 0.0
    %59 = vmatpush1.msra.mxu0 0.0
    %60 = vmatprep.subr.mxu0 0.0
    %61 = vmatpush1.msra.mxu0 0.0
    %62 = vmatprep.subr.mxu0 0.0
    %63 = vmatpush1.msra.mxu0 0.0
    %64 = vmatprep.subr.mxu0 0.0
    %65 = vmatpush1.msra.mxu0 0.0
    %66 = vmatprep.subr.mxu0 0.0
    %67 = vmatpush1.msra.mxu0 0.0
    %68 = vmatprep.subr.mxu0 0.0
    %69 = vmatpush1.msra.mxu0 0.0
    %70 = vmatprep.subr.mxu0 0.0
    %71 = vmatpush1.msra.mxu0 0.0
    %72 = vmatprep.subr.mxu0 0.0
    %73 = vmatpush1.msra.mxu0 0.0
    %74 = vmatprep.subr.mxu0 0.0
    %75 = vmatpush1.msra.mxu0 0.0
    %76 = vmatprep.subr.mxu0 0.0
    %77 = vmatpush1.msra.mxu0 %v44
    %78 = vmatprep.subr.mxu0 0.0
    %79 = vmatpush1.msra.mxu0 %v43
    %80 = vmatprep.subr.mxu0 0.0
    %81 = vmatpush1.msra.mxu0 %v42
    %82 = vmatprep.subr.mxu0 0.0
    %83 = vmatpush1.msra.mxu0 %v41
    %84 = vmatprep.subr.mxu0 0.0
    %85 = vmatpush2.msra.mxu0 0.0
    %86 = vmatprep.subr.mxu0 0.0
    %87 = vmatpush2.msra.mxu0 0.0
    %88 = vmatprep.subr.mxu0 0.0
    %89 = vmatpush2.msra.mxu0 0.0
    %90 = vmatprep.subr.mxu0 0.0
    %91 = vmatpush2.msra.mxu0 0.0
    %92 = vmatprep.subr.mxu0 0.0
    %93 = vmatpush2.msra.mxu0 0.0
    %94 = vmatprep.subr.mxu0 0.0
    %95 = vmatpush2.msra.mxu0 0.0
    %96 = vmatprep.subr.mxu0 0.0
    %97 = vmatpush2.msra.mxu0 0.0
    %98 = vmatprep.subr.mxu0 0.0
    %99 = vmatpush2.msra.mxu0 0.0
    %100 = vmatprep.subr.mxu0 0.0
    %101 = vmatpush2.msra.mxu0 0.0
    %102 = vmatprep.subr.mxu0 0.0
    %103 = vmatpush2.msra.mxu0 0.0
    %104 = vmatprep.subr.mxu0 0.0
    %105 = vmatpush2.msra.mxu0 0.0
    %106 = vmatprep.subr.mxu0 0.0
    %107 = vmatpush2.msra.mxu0 0.0
    %108 = vmatprep.subr.mxu0 0.0
    %109 = vmatpush2.msra.mxu0 0.0
    %110 = vmatprep.subr.mxu0 0.0
    %111 = vmatpush2.msra.mxu0 0.0
    %112 = vmatprep.subr.mxu0 0.0
    %113 = vmatpush2.msra.mxu0 0.0
    %114 = vmatprep.subr.mxu0 0.0
    %115 = vmatpush2.msra.mxu0 0.0
    %116 = vmatprep.mubr.f32.mxu0 0.0
    %117 = vmatmul.mubr.f32.gmra.mxu0 %v47
    %v118 = vpop.f32.mrf.mxu0
    %v119 = vadd.f32 0.0, %v118
    %v120 = vpop.f32.mrf.mxu0
    %121 = vmatprep.mubr.f32.mxu0 0.0
    %122 = vmatmul.mubr.f32.gmra.mxu0 %v50
    %v123 = vpop.f32.mrf.mxu0
    %v124 = vadd.f32 0.0, %v123
    %v125 = vpop.f32.mrf.mxu0
    %126 = vdwg.mxu0
    %127 = vst [vmem:[%s2] sm:$0xff] %v119
    %128 = vst [vmem:[%s2 + $0x8] sm:$0xff] %v124
    // Predicated region
    $region18: #{gqa_qkv_forward.1} parent=1 // pred_check
      _
    $region19: #{gqa_qkv_forward.1} parent=1 // pred_check_branch
      %130 = sbr.rel (0) target = $region21
    $region20: #{gqa_qkv_forward.1} parent=1 // pred_region
      _
    $region21: #{gqa_qkv_forward.1} parent=1 // pred_fallthru
      _
    // Predicated region
    $region22: #{gqa_qkv_forward.1} parent=1 // pred_check
      _
    $region23: #{gqa_qkv_forward.1} parent=1 // pred_check_branch
      %132 = sbr.rel (0) target = $region25
    $region24: #{gqa_qkv_forward.1} parent=1 // pred_region
      _
    $region25: #{gqa_qkv_forward.1} parent=1 // pred_fallthru
      _
    %133 = vsyncpa [#allocation3], 1
    %134 = vsyncpa [#allocation5], 1

</llo_original>
